<compile_context>
chip_gen: v7x
topology: tpu7x:2x2x1
jax: 0.10.0
libtpu: 0.0.40
codegen_flags: <defaults>
</compile_context>

<pallas_src>
import functools

import jax
import jax.numpy as jnp
from jax.experimental import pallas as pl
from jax.experimental.pallas import tpu as pltpu


def _round_up(x, m):
    return (x + m - 1) // m * m


def _pad_to(x, shape):
    pads = [(0, t - s) for t, s in zip(shape, x.shape)]
    if any(p[1] for p in pads):
        return jnp.pad(x, pads)
    return x


def _head_kernel(img_ref, we_ref, be_ref, wc_ref, bc_ref, out_ref, acc_ref, *, inv_tokens):
    """Fused: token mean-pool (excluding CLS) -> encoder-stub projection -> linear classifier.

    img_ref : [TN, TL, Dp]    streamed token tile
    we_ref  : [Dp, LATp]      encoder-stub projection weight   (VMEM resident)
    be_ref  : [1, LATp]       encoder-stub projection bias     (VMEM resident)
    wc_ref  : [LATp, Cp]      classifier weight                (VMEM resident)
    bc_ref  : [1, Cp]         classifier bias                  (VMEM resident)
    out_ref : [TN, Cp]        logits (lane-dense, padded to 128), resident across the token axis
    acc_ref : [TN, Dp]        f32 token-sum accumulator (VMEM scratch)
    """
    l = pl.program_id(1)

    @pl.when(l == 0)
    def _init():
        acc_ref[...] = jnp.zeros_like(acc_ref)

    tile = img_ref[...].astype(jnp.float32)          # [TN, TL, Dp]
    tok_sum = jnp.sum(tile, axis=1)                  # [TN, Dp]
    # MeanPool == torch.mean(img_enc[:, 1:], dim=1): drop the CLS token (global token 0),
    # which only lives in the first token tile.
    is_first_tile = (l == 0).astype(jnp.float32)
    acc_ref[...] += tok_sum - is_first_tile * tile[:, 0, :]

    @pl.when(l == pl.num_programs(1) - 1)
    def _finalize():
        # Pool-before-project is exact only because the encoder stub is linear; revisit if the
        # real (nonlinear) LongNet slide encoder ever replaces the stub.
        pooled = acc_ref[...] * inv_tokens                                            # [TN, Dp]
        h = jnp.dot(pooled, we_ref[...], preferred_element_type=jnp.float32) + be_ref[...]
        logits = jnp.dot(h, wc_ref[...], preferred_element_type=jnp.float32) + bc_ref[...]
        out_ref[...] = logits.astype(out_ref.dtype)


def classification_head_forward(images, coords, mask, params, *, batch_tile=8, token_tile=256):
    """Forward pass mirroring ClassificationHead.forward with pool_method='MeanPool'.

    images: [N, L, D] float32 tile embeddings
    coords: [N, L, 2]  (only consumed by the real slide encoder's positional embedding)
    mask:   [N, L] bool (the torch forward overwrites it with zeros, so it is a no-op)
    """
    # TODO(synk): the pretrained LongNet slide encoder (which consumes `coords`) is replaced by a
    # deterministic linear projection; `coords`/`mask` are accepted for signature fidelity only
    # (note the mean also ignores any padding mask, exactly like the torch forward with zero masks).
    del coords, mask

    if images.ndim == 2:
        images = images[None]
    assert images.ndim == 3
    images = images.astype(jnp.float32)

    w_enc = params["w_enc"].astype(jnp.float32)
    b_enc = params["b_enc"].astype(jnp.float32)
    w_cls = params["w_cls"].astype(jnp.float32)
    b_cls = params["b_cls"].astype(jnp.float32)

    N, L, D = images.shape
    latent = w_enc.shape[1]
    n_classes = w_cls.shape[1]
    assert L >= 2, "MeanPool over img_enc[:, 1:] needs at least 2 tokens"

    # Lane (128) / sublane (8) aligned padded sizes; zero padding is exact for this linear head.
    d_p = _round_up(D, 128)
    lat_p = _round_up(latent, 128)
    c_p = _round_up(n_classes, 128)           # lane-dense output, sliced back below

    tn = min(batch_tile, _round_up(N, 8))     # batch tile (multiple of 8 -> aligned output block)
    n_p = _round_up(N, tn)
    tl = min(token_tile, _round_up(L, 8))     # token tile; default keeps double-buffered input
    l_p = _round_up(L, tl)                    # tiles well under v7x's 64 MiB VMEM at D=1536 f32

    images_p = _pad_to(images, (n_p, l_p, d_p))
    w_enc_p = _pad_to(w_enc, (d_p, lat_p))
    b_enc_p = _pad_to(b_enc, (1, lat_p))
    w_cls_p = _pad_to(w_cls, (lat_p, c_p))
    b_cls_p = _pad_to(b_cls, (1, c_p))

    grid = (n_p // tn, l_p // tl)
    kernel = functools.partial(_head_kernel, inv_tokens=1.0 / (L - 1))

    out_p = pl.pallas_call(
        kernel,
        out_shape=jax.ShapeDtypeStruct((n_p, c_p), jnp.float32),
        grid_spec=pltpu.PrefetchScalarGridSpec(
            num_scalar_prefetch=0,
            grid=grid,
            in_specs=[
                pl.BlockSpec((tn, tl, d_p), lambda i, l: (i, l, 0)),   # streamed token tiles
                pl.BlockSpec((d_p, lat_p), lambda i, l: (0, 0)),       # resident encoder weight
                pl.BlockSpec((1, lat_p), lambda i, l: (0, 0)),         # resident encoder bias
                pl.BlockSpec((lat_p, c_p), lambda i, l: (0, 0)),       # resident classifier weight
                pl.BlockSpec((1, c_p), lambda i, l: (0, 0)),           # resident classifier bias
            ],
            out_specs=pl.BlockSpec((tn, c_p), lambda i, l: (i, 0)),    # resident across token axis
            scratch_shapes=[pltpu.VMEM((tn, d_p), jnp.float32)],       # token-sum accumulator
        ),
        compiler_params=pltpu.CompilerParams(
            dimension_semantics=("parallel", "arbitrary"),             # batch across TCs on v7x
            vmem_limit_bytes=48 * 1024 * 1024,                         # explicit, with headroom
        ),
    )(images_p, w_enc_p, b_enc_p, w_cls_p, b_cls_p)

    return out_p[:N, :n_classes]


def init_params(key, input_dim, latent_dim, n_classes):
    k1, k2, k3, k4 = jax.random.split(key, 4)
    return {
        "w_enc": jax.random.normal(k1, (input_dim, latent_dim), jnp.float32) * 0.02,
        "b_enc": jax.random.normal(k2, (1, latent_dim), jnp.float32) * 0.02,
        "w_cls": jax.random.normal(k3, (latent_dim, n_classes), jnp.float32) * 0.02,
        "b_cls": jax.random.normal(k4, (1, n_classes), jnp.float32) * 0.02,
    }


def _reference(images, params):
    """Pure-JAX reference: per-token encoder stub -> mean over non-CLS tokens -> classifier."""
    h = jnp.einsum("nld,dk->nlk", images, params["w_enc"]) + params["b_enc"]
    pooled = jnp.mean(h[:, 1:], axis=1)                    # torch.mean(img_enc[:, 1:], dim=1)
    return pooled @ params["w_cls"] + params["b_cls"]


if __name__ == "__main__":
    # Small, module-consistent shapes: batch N=2, tokens L=8, input_dim D=32,
    # latent_dim=32, n_classes=2.
    N, L, D, LATENT, C = 2, 8, 32, 32, 2
    key = jax.random.PRNGKey(0)
    k_img, k_coord, k_param = jax.random.split(key, 3)

    images = jax.random.normal(k_img, (N, L, D), jnp.float32)
    coords = jax.random.uniform(k_coord, (N, L, 2), jnp.float32)
    mask = jnp.zeros((N, L), dtype=jnp.bool_)

    params = init_params(k_param, D, LATENT, C)

    logits = classification_head_forward(images, coords, mask, params)
    logits = jax.block_until_ready(logits)

    ref = _reference(images, params)
    assert logits.shape == (N, C), logits.shape
    assert jnp.allclose(logits, ref, atol=1e-4, rtol=1e-4), (logits, ref)

    print("KERNEL_OK")
</pallas_src>

<mosaic_0001>
module attributes {stable_mosaic.version = 11 : i64} {
  func.func @_head_kernel(%arg0: i32, %arg1: i32, %arg2: memref<8x8x128xf32, #tpu.memory_space<vmem>>, %arg3: memref<128x128xf32, #tpu.memory_space<vmem>>, %arg4: memref<1x128xf32, #tpu.memory_space<vmem>>, %arg5: memref<128x128xf32, #tpu.memory_space<vmem>>, %arg6: memref<1x128xf32, #tpu.memory_space<vmem>>, %arg7: memref<8x128xf32, #tpu.memory_space<vmem>>, %arg8: memref<8x128xf32, #tpu.memory_space<vmem>>) attributes {dimension_semantics = [#tpu.dimension_semantics<parallel>, #tpu.dimension_semantics<arbitrary>], iteration_bounds = array<i64: 1, 1>, scalar_prefetch = 0 : i64, scratch_operands = 1 : i64, tpu.core_type = #tpu.core_type<tc>, window_params = [{transform_indices = @transform_0, window_bounds = array<i64: 8, 8, 128>}, {pipeline_mode = #tpu.pipeline_mode<synchronous>, transform_indices = @transform_1, window_bounds = array<i64: 128, 128>}, {pipeline_mode = #tpu.pipeline_mode<synchronous>, transform_indices = @transform_2, window_bounds = array<i64: 1, 128>}, {pipeline_mode = #tpu.pipeline_mode<synchronous>, transform_indices = @transform_3, window_bounds = array<i64: 128, 128>}, {pipeline_mode = #tpu.pipeline_mode<synchronous>, transform_indices = @transform_4, window_bounds = array<i64: 1, 128>}, {transform_indices = @transform_5, window_bounds = array<i64: 8, 128>}]} {
    %c0_i32 = arith.constant 0 : i32
    %0 = arith.cmpi eq, %arg1, %c0_i32 : i32
    %1 = arith.extui %0 : i1 to i32
    %c0_i32_0 = arith.constant 0 : i32
    %2 = arith.cmpi ne, %1, %c0_i32_0 : i32
    scf.if %2 {
      %cst_10 = arith.constant 0.000000e+00 : f32
      %19 = vector.broadcast %cst_10 : f32 to vector<8x128xf32>
      %c0_11 = arith.constant 0 : index
      %c0_12 = arith.constant 0 : index
      %20 = vector.load %arg8[%c0_11, %c0_12] : memref<8x128xf32, #tpu.memory_space<vmem>>, vector<8x128xf32>
      tpu.vector_store %arg8[%c0_11, %c0_12], %19 {strides = array<i32>} : memref<8x128xf32, #tpu.memory_space<vmem>>, vector<8x128xf32>,
    } else {
    }
    %c0 = arith.constant 0 : index
    %c0_1 = arith.constant 0 : index
    %c0_2 = arith.constant 0 : index
    %3 = vector.load %arg2[%c0, %c0_1, %c0_2] : memref<8x8x128xf32, #tpu.memory_space<vmem>>, vector<8x8x128xf32>
    %cst = arith.constant dense<0.000000e+00> : vector<8x128xf32>
    %4 = vector.multi_reduction <add>, %3, %cst [1] : vector<8x8x128xf32> to vector<8x128xf32>
    %c0_i32_3 = arith.constant 0 : i32
    %5 = arith.cmpi eq, %arg1, %c0_i32_3 : i32
    %6 = arith.extui %5 : i1 to i32
    %7 = arith.sitofp %6 : i32 to f32
    %c0_4 = arith.constant 0 : index
    %c0_5 = arith.constant 0 : index
    %8 = vector.load %arg8[%c0_4, %c0_5] : memref<8x128xf32, #tpu.memory_space<vmem>>, vector<8x128xf32>
    %9 = vector.extract_strided_slice %3 {offsets = [0, 0, 0], sizes = [8, 1, 128], strides = [1, 1, 1]} : vector<8x8x128xf32> to vector<8x1x128xf32>
    %10 = vector.shape_cast %9 : vector<8x1x128xf32> to vector<8x128xf32>
    %11 = vector.broadcast %7 : f32 to vector<8x128xf32>
    %12 = arith.mulf %11, %10 : vector<8x128xf32>
    %13 = arith.subf %4, %12 : vector<8x128xf32>
    %14 = arith.addf %8, %13 : vector<8x128xf32>
    %c0_6 = arith.constant 0 : index
    %c0_7 = arith.constant 0 : index
    %15 = vector.load %arg8[%c0_6, %c0_7] : memref<8x128xf32, #tpu.memory_space<vmem>>, vector<8x128xf32>
    tpu.vector_store %arg8[%c0_6, %c0_7], %14 {strides = array<i32>} : memref<8x128xf32, #tpu.memory_space<vmem>>, vector<8x128xf32>,
    %c0_i32_8 = arith.constant 0 : i32
    %16 = arith.cmpi eq, %arg1, %c0_i32_8 : i32
    %17 = arith.extui %16 : i1 to i32
    %c0_i32_9 = arith.constant 0 : i32
    %18 = arith.cmpi ne, %17, %c0_i32_9 : i32
    scf.if %18 {
      %c0_10 = arith.constant 0 : index
      %c0_11 = arith.constant 0 : index
      %19 = vector.load %arg8[%c0_10, %c0_11] : memref<8x128xf32, #tpu.memory_space<vmem>>, vector<8x128xf32>
      %cst_12 = arith.constant 0.142857149 : f32
      %20 = vector.broadcast %cst_12 : f32 to vector<8x128xf32>
      %21 = arith.mulf %19, %20 : vector<8x128xf32>
      %c0_13 = arith.constant 0 : index
      %c0_14 = arith.constant 0 : index
      %22 = vector.load %arg3[%c0_13, %c0_14] : memref<128x128xf32, #tpu.memory_space<vmem>>, vector<128x128xf32>
      %cst_15 = arith.constant dense<0.000000e+00> : vector<8x128xf32>
      %23 = tpu.matmul %21, %22, %cst_15 {dimension_numbers = #tpu.dot_dimension_numbers<[1], [0], [0], [1], [0, 0, 1, 1], [], []>} : vector<8x128xf32>, vector<128x128xf32>, vector<8x128xf32> -> vector<8x128xf32>
      %c0_16 = arith.constant 0 : index
      %c0_17 = arith.constant 0 : index
      %24 = vector.load %arg4[%c0_16, %c0_17] : memref<1x128xf32, #tpu.memory_space<vmem>>, vector<1x128xf32>
      %25 = vector.broadcast %24 : vector<1x128xf32> to vector<8x128xf32>
      %26 = arith.addf %23, %25 : vector<8x128xf32>
      %c0_18 = arith.constant 0 : index
      %c0_19 = arith.constant 0 : index
      %27 = vector.load %arg5[%c0_18, %c0_19] : memref<128x128xf32, #tpu.memory_space<vmem>>, vector<128x128xf32>
      %cst_20 = arith.constant dense<0.000000e+00> : vector<8x128xf32>
      %28 = tpu.matmul %26, %27, %cst_20 {dimension_numbers = #tpu.dot_dimension_numbers<[1], [0], [0], [1], [0, 0, 1, 1], [], []>} : vector<8x128xf32>, vector<128x128xf32>, vector<8x128xf32> -> vector<8x128xf32>
      %c0_21 = arith.constant 0 : index
      %c0_22 = arith.constant 0 : index
      %29 = vector.load %arg6[%c0_21, %c0_22] : memref<1x128xf32, #tpu.memory_space<vmem>>, vector<1x128xf32>
      %30 = vector.broadcast %29 : vector<1x128xf32> to vector<8x128xf32>
      %31 = arith.addf %28, %30 : vector<8x128xf32>
      %c0_23 = arith.constant 0 : index
      %c0_24 = arith.constant 0 : index
      %32 = vector.load %arg7[%c0_23, %c0_24] : memref<8x128xf32, #tpu.memory_space<vmem>>, vector<8x128xf32>
      tpu.vector_store %arg7[%c0_23, %c0_24], %31 {strides = array<i32>} : memref<8x128xf32, #tpu.memory_space<vmem>>, vector<8x128xf32>,
    } else {
    }
    return
  }
  func.func @transform_0(%arg0: i32, %arg1: i32) -> (i32, i32, i32) {
    %c0_i32 = arith.constant 0 : i32
    %c0_i32_0 = arith.constant 0 : i32
    return %arg0, %arg1, %c0_i32 : i32, i32, i32
  }
  func.func @transform_1(%arg0: i32, %arg1: i32) -> (i32, i32) {
    %c0_i32 = arith.constant 0 : i32
    %c0_i32_0 = arith.constant 0 : i32
    %c0_i32_1 = arith.constant 0 : i32
    return %c0_i32, %c0_i32_0 : i32, i32
  }
  func.func @transform_2(%arg0: i32, %arg1: i32) -> (i32, i32) {
    %c0_i32 = arith.constant 0 : i32
    %c0_i32_0 = arith.constant 0 : i32
    %c0_i32_1 = arith.constant 0 : i32
    return %c0_i32, %c0_i32_0 : i32, i32
  }
  func.func @transform_3(%arg0: i32, %arg1: i32) -> (i32, i32) {
    %c0_i32 = arith.constant 0 : i32
    %c0_i32_0 = arith.constant 0 : i32
    %c0_i32_1 = arith.constant 0 : i32
    return %c0_i32, %c0_i32_0 : i32, i32
  }
  func.func @transform_4(%arg0: i32, %arg1: i32) -> (i32, i32) {
    %c0_i32 = arith.constant 0 : i32
    %c0_i32_0 = arith.constant 0 : i32
    %c0_i32_1 = arith.constant 0 : i32
    return %c0_i32, %c0_i32_0 : i32, i32
  }
  func.func @transform_5(%arg0: i32, %arg1: i32) -> (i32, i32) {
    %c0_i32 = arith.constant 0 : i32
    %c0_i32_0 = arith.constant 0 : i32
    return %arg0, %c0_i32 : i32, i32
  }
}

</mosaic_0001>

<llo_original>
// kernel: tpu_custom_call.1
$region0: #{tpu_custom_call.1}
  #allocation0 [shape = 'u32[]', space=smem, size = 0x4, offset = 0x4, fixed_abs, tag = 'smem constant byte address 0x4 - core index']
  #allocation1 [shape = 'u32[144,128]{1,0:T(1,128)}', space=vmem, size = 0x12000, scoped, tag = 'internal scratch']
  #allocation2 [shape = 'f32[8,128]{1,0:T(8,128)}', space=vmem, size = 0x1000, scoped, tag = 'scratch operand']
  %s0 = inlined_call_operand.hbm [shape: f32[8,8,128], index: 0, kind: input, shape index: {}]
  %s1 = inlined_call_operand.hbm [shape: f32[128,128], index: 1, kind: input, shape index: {}]
  %s2 = inlined_call_operand.vmem [shape: f32[1,128], index: 2, kind: input, shape index: {}]
  %s3 = inlined_call_operand.hbm [shape: f32[128,128], index: 3, kind: input, shape index: {}]
  %s4 = inlined_call_operand.vmem [shape: f32[1,128], index: 4, kind: input, shape index: {}]
  %s5 = inlined_call_operand.hbm [shape: f32[8,128], index: 5, kind: output, shape index: {}]
  %s6 = sld [smem:[#allocation0]]
  $region50: #{tpu_custom_call.1} parent=0
    _
  %s8 = ssub.s32 1, %s6
  %s9 = scalar_select 0, %s8, %s6
  $region1: #{tpu_custom_call.1} parent=0
    #allocation3 [shape = 'u8[32768]{0}', space=vmem, size = 0x8000, scoped, tag = 'input window, operand 0, single buffered']
    #allocation4 [shape = 's32[1]{0}', space=sflag, size = 0x4, scoped, tag = 'scoped memory for tpu_custom_call.1']
    #allocation5 [shape = 's32[1]{0}', space=sflag, size = 0x4, scoped, tag = 'scoped memory for tpu_custom_call.1']
    #allocation6 [shape = 'u8[65536]{0}', space=vmem, size = 0x10000, scoped, tag = 'input window, operand 1, single buffered']
    #allocation7 [shape = 's32[1]{0}', space=sflag, size = 0x4, scoped, tag = 'scoped memory for tpu_custom_call.1']
    #allocation8 [shape = 'u8[65536]{0}', space=vmem, size = 0x10000, scoped, tag = 'input window, operand 3, single buffered']
    #allocation9 [shape = 'u8[4096]{0}', space=vmem, size = 0x1000, scoped, tag = 'output window, operand 0, single buffered']
    %10 = vsyncpa [#allocation4], 0
    %11 = vsyncpa [#allocation7], 0
    %12 = vsyncpa [#allocation5], 0
    // Predicated region
    $region2: #{tpu_custom_call.1} parent=1 // pred_check
      _
    $region3: #{tpu_custom_call.1} parent=1 // pred_check_branch
      %14 = sbr.rel (0) target = $region5
    $region4: #{tpu_custom_call.1} parent=1 // pred_region
      %s16 = ssub.s32 1024, 1024
      %17 = vsyncadd [#allocation4], %s16
      %s18 = sshll.u32 [#allocation3], 4
      %s19 = int_to_ptr.vmem [resolvable:$true] %s18
      %24 = dma.hbm_to_vmem [thread:$0]  %s0, 1024, %s19, [#allocation4], 128, 128, 8
    $region5: #{tpu_custom_call.1} parent=1 // pred_fallthru
      _
    // Predicated region
    $region6: #{tpu_custom_call.1} parent=1 // pred_check
      _
    $region7: #{tpu_custom_call.1} parent=1 // pred_check_branch
      %26 = sbr.rel (0) target = $region9
    $region8: #{tpu_custom_call.1} parent=1 // pred_region
      %s28 = ssub.s32 2048, 2048
      %29 = vsyncadd [#allocation7], %s28
      %s30 = sshll.u32 [#allocation6], 4
      %s31 = int_to_ptr.vmem [resolvable:$true] %s30
      %36 = dma.hbm_to_vmem [thread:$0]  %s1, 2048, %s31, [#allocation7], 128, 128, 8
    $region9: #{tpu_custom_call.1} parent=1 // pred_fallthru
      _
    // Predicated region
    $region10: #{tpu_custom_call.1} parent=1 // pred_check
      _
    $region11: #{tpu_custom_call.1} parent=1 // pred_check_branch
      %38 = sbr.rel (0) target = $region13
    $region12: #{tpu_custom_call.1} parent=1 // pred_region
      _
    $region13: #{tpu_custom_call.1} parent=1 // pred_fallthru
      _
    // Predicated region
    $region14: #{tpu_custom_call.1} parent=1 // pred_check
      _
    $region15: #{tpu_custom_call.1} parent=1 // pred_check_branch
      %40 = sbr.rel (0) target = $region17
    $region16: #{tpu_custom_call.1} parent=1 // pred_region
      %s42 = ssub.s32 2048, 2048
      %43 = vsyncadd [#allocation7], %s42
      %s44 = sshll.u32 [#allocation8], 4
      %s45 = int_to_ptr.vmem [resolvable:$true] %s44
      %50 = dma.hbm_to_vmem [thread:$0]  %s3, 2048, %s45, [#allocation7], 128, 128, 8
    $region17: #{tpu_custom_call.1} parent=1 // pred_fallthru
      _
    // Predicated region
    $region18: #{tpu_custom_call.1} parent=1 // pred_check
      _
    $region19: #{tpu_custom_call.1} parent=1 // pred_check_branch
      %52 = sbr.rel (0) target = $region21
    $region20: #{tpu_custom_call.1} parent=1 // pred_region
      _
    $region21: #{tpu_custom_call.1} parent=1 // pred_fallthru
      _
    // Predicated region
    $region22: #{tpu_custom_call.1} parent=1 // pred_check
      _
    $region23: #{tpu_custom_call.1} parent=1 // pred_check_branch
      %54 = sbr.rel (0) target = $region25
    $region24: #{tpu_custom_call.1} parent=1 // pred_region
      %55 = dma.done [#allocation4], 1024
    $region25: #{tpu_custom_call.1} parent=1 // pred_fallthru
      _
    // Predicated region
    $region26: #{tpu_custom_call.1} parent=1 // pred_check
      _
    $region27: #{tpu_custom_call.1} parent=1 // pred_check_branch
      %57 = sbr.rel (0) target = $region29
    $region28: #{tpu_custom_call.1} parent=1 // pred_region
      %58 = dma.done [#allocation7], 2048
    $region29: #{tpu_custom_call.1} parent=1 // pred_fallthru
      _
    // Predicated region
    $region30: #{tpu_custom_call.1} parent=1 // pred_check
      _
    $region31: #{tpu_custom_call.1} parent=1 // pred_check_branch
      %60 = sbr.rel (0) target = $region33
    $region32: #{tpu_custom_call.1} parent=1 // pred_region
      %61 = dma.done [#allocation7], 2048
    $region33: #{tpu_custom_call.1} parent=1 // pred_fallthru
      _
    %p62 = scmp.eq.s32.totalorder 0, 0
    // Predicated region
    $region34: #{tpu_custom_call.1} parent=1 // pred_check
      %p63 = pneg %p62
    $region35: #{tpu_custom_call.1} parent=1 // pred_check_branch
      %65 = sbr.rel (%p63) target = $region37
    $region36: #{tpu_custom_call.1} parent=1 // pred_region
      %66 = vst [vmem:[#allocation2] sm:$0xff] 0.0
    $region37: #{tpu_custom_call.1} parent=1 // pred_fallthru
      _
    %v67 = vld [vmem:[#allocation3] sm:$0xff]
    %v68 = vld [vmem:[#allocation3 + $0x8] sm:$0xff]
    %v69 = vld [vmem:[#allocation3 + $0x10] sm:$0xff]
    %v70 = vld [vmem:[#allocation3 + $0x18] sm:$0xff]
    %v71 = vld [vmem:[#allocation3 + $0x20] sm:$0xff]
    %v72 = vld [vmem:[#allocation3 + $0x28] sm:$0xff]
    %v73 = vld [vmem:[#allocation3 + $0x30] sm:$0xff]
    %v74 = vld [vmem:[#allocation3 + $0x38] sm:$0xff]
    %v75 = vrot.slane %v67, 4
    %v76 = vadd.f32 %v67, %v75
    %v77 = vrot.slane %v76, 2
    %v78 = vadd.f32 %v76, %v77
    %v79 = vrot.slane %v78, 1
    %v80 = vadd.f32 %v78, %v79
    %v81 = vrot.slane %v68, 4
    %v82 = vadd.f32 %v68, %v81
    %v83 = vrot.slane %v82, 2
    %v84 = vadd.f32 %v82, %v83
    %v85 = vrot.slane %v84, 1
    %v86 = vadd.f32 %v84, %v85
    %v87 = vrot.slane %v69, 4
    %v88 = vadd.f32 %v69, %v87
    %v89 = vrot.slane %v88, 2
    %v90 = vadd.f32 %v88, %v89
    %v91 = vrot.slane %v90, 1
    %v92 = vadd.f32 %v90, %v91
    %v93 = vrot.slane %v70, 4
    %v94 = vadd.f32 %v70, %v93
    %v95 = vrot.slane %v94, 2
    %v96 = vadd.f32 %v94, %v95
    %v97 = vrot.slane %v96, 1
    %v98 = vadd.f32 %v96, %v97
    %v99 = vrot.slane %v71, 4
    %v100 = vadd.f32 %v71, %v99
    %v101 = vrot.slane %v100, 2
    %v102 = vadd.f32 %v100, %v101
    %v103 = vrot.slane %v102, 1
    %v104 = vadd.f32 %v102, %v103
    %v105 = vrot.slane %v72, 4
    %v106 = vadd.f32 %v72, %v105
    %v107 = vrot.slane %v106, 2
    %v108 = vadd.f32 %v106, %v107
    %v109 = vrot.slane %v108, 1
    %v110 = vadd.f32 %v108, %v109
    %v111 = vrot.slane %v73, 4
    %v112 = vadd.f32 %v73, %v111
    %v113 = vrot.slane %v112, 2
    %v114 = vadd.f32 %v112, %v113
    %v115 = vrot.slane %v114, 1
    %v116 = vadd.f32 %v114, %v115
    %v117 = vrot.slane %v74, 4
    %v118 = vadd.f32 %v74, %v117
    %v119 = vrot.slane %v118, 2
    %v120 = vadd.f32 %v118, %v119
    %v121 = vrot.slane %v120, 1
    %v122 = vadd.f32 %v120, %v121
    %s123 = scalar_select %p62, 1, 0
    %s124 = scvt.s32.f32 %s123
    %v125 = vld [vmem:[#allocation2] sm:$0xff]
    %v126 = vstv %s124
    %v127 = vmul.f32 %v126, %v67
    %v128 = vmul.f32 %v126, %v68
    %v129 = vmul.f32 %v126, %v69
    %v130 = vmul.f32 %v126, %v70
    %v131 = vmul.f32 %v126, %v71
    %v132 = vmul.f32 %v126, %v72
    %v133 = vmul.f32 %v126, %v73
    %v134 = vmul.f32 %v126, %v74
    %v135 = vsub.f32 %v80, %v127
    %v136 = vsub.f32 %v86, %v128
    %v137 = vsub.f32 %v92, %v129
    %v138 = vsub.f32 %v98, %v130
    %v139 = vsub.f32 %v104, %v131
    %v140 = vsub.f32 %v110, %v132
    %v141 = vsub.f32 %v116, %v133
    %v142 = vsub.f32 %v122, %v134
    %v151 = vrot.slane %v136, 7
    %vm152 = vcmask 1041409
    %v153 = vsel %vm152, %v151, %v135
    %v154 = vrot.slane %v137, 6
    %vm155 = vcmask 1042434
    %v156 = vsel %vm155, %v154, %v153
    %v157 = vrot.slane %v138, 5
    %vm158 = vcmask 1043459
    %v159 = vsel %vm158, %v157, %v156
    %v160 = vrot.slane %v139, 4
    %vm161 = vcmask 1044484
    %v162 = vsel %vm161, %v160, %v159
    %v163 = vrot.slane %v140, 3
    %vm164 = vcmask 1045509
    %v165 = vsel %vm164, %v163, %v162
    %v166 = vrot.slane %v141, 2
    %vm167 = vcmask 1046534
    %v168 = vsel %vm167, %v166, %v165
    %v169 = vrot.slane %v142, 1
    %vm170 = vcmask 1047559
    %v171 = vsel %vm170, %v169, %v168
    %v173 = vadd.f32 %v125, %v171
    %174 = vst [vmem:[#allocation2] sm:$0xff] %v173
    // Predicated region
    $region38: #{tpu_custom_call.1} parent=1 // pred_check
      %p175 = pneg %p62
    $region39: #{tpu_custom_call.1} parent=1 // pred_check_branch
      %177 = sbr.rel (%p175) target = $region41
    $region40: #{tpu_custom_call.1} parent=1 // pred_region
      %v178 = vld [vmem:[#allocation2] sm:$0xff]
      %v179 = vmul.f32 %v178, 0.14285715
      %v180 = vld [vmem:[#allocation6] sm:$0xff]
      %v181 = vld [vmem:[#allocation6 + $0x8] sm:$0xff]
      %v182 = vld [vmem:[#allocation6 + $0x10] sm:$0xff]
      %v183 = vld [vmem:[#allocation6 + $0x18] sm:$0xff]
      %v184 = vld [vmem:[#allocation6 + $0x20] sm:$0xff]
      %v185 = vld [vmem:[#allocation6 + $0x28] sm:$0xff]
      %v186 = vld [vmem:[#allocation6 + $0x30] sm:$0xff]
      %v187 = vld [vmem:[#allocation6 + $0x38] sm:$0xff]
      %v188 = vld [vmem:[#allocation6 + $0x40] sm:$0xff]
      %v189 = vld [vmem:[#allocation6 + $0x48] sm:$0xff]
      %v190 = vld [vmem:[#allocation6 + $0x50] sm:$0xff]
      %v191 = vld [vmem:[#allocation6 + $0x58] sm:$0xff]
      %v192 = vld [vmem:[#allocation6 + $0x60] sm:$0xff]
      %v193 = vld [vmem:[#allocation6 + $0x68] sm:$0xff]
      %v194 = vld [vmem:[#allocation6 + $0x70] sm:$0xff]
      %v195 = vld [vmem:[#allocation6 + $0x78] sm:$0xff]
      %v196 = vld [vmem:[%s2] sm:$0x1]
      %v198 = vlaneseq
      %v199 = vshrl.u32 %v198, 7
      %v200 = vsub.s32 0, %v199
      %v201 = vrot.slane %v196, %v200
      %203 = vmatprep.subr.mxu0 0.0
      %204 = vmatpush1.msra.mxu0 %v180
      %205 = vmatprep.subr.mxu0 0.0
      %206 = vmatpush1.msra.mxu0 %v181
      %207 = vmatprep.subr.mxu0 0.0
      %208 = vmatpush1.msra.mxu0 %v182
      %209 = vmatprep.subr.mxu0 0.0
      %210 = vmatpush1.msra.mxu0 %v183
      %211 = vmatprep.subr.mxu0 0.0
      %212 = vmatpush1.msra.mxu0 %v184
      %213 = vmatprep.subr.mxu0 0.0
      %214 = vmatpush1.msra.mxu0 %v185
      %215 = vmatprep.subr.mxu0 0.0
      %216 = vmatpush1.msra.mxu0 %v186
      %217 = vmatprep.subr.mxu0 0.0
      %218 = vmatpush1.msra.mxu0 %v187
      %219 = vmatprep.subr.mxu0 0.0
      %220 = vmatpush1.msra.mxu0 %v188
      %221 = vmatprep.subr.mxu0 0.0
      %222 = vmatpush1.msra.mxu0 %v189
      %223 = vmatprep.subr.mxu0 0.0
      %224 = vmatpush1.msra.mxu0 %v190
      %225 = vmatprep.subr.mxu0 0.0
      %226 = vmatpush1.msra.mxu0 %v191
      %227 = vmatprep.subr.mxu0 0.0
      %228 = vmatpush1.msra.mxu0 %v192
      %229 = vmatprep.subr.mxu0 0.0
      %230 = vmatpush1.msra.mxu0 %v193
      %231 = vmatprep.subr.mxu0 0.0
      %232 = vmatpush1.msra.mxu0 %v194
      %233 = vmatprep.subr.mxu0 0.0
      %234 = vmatpush1.msra.mxu0 %v195
      %235 = vmatprep.subr.mxu0 0.0
      %236 = vmatpush1.msra.mxu0 0.0
      %237 = vmatprep.subr.mxu0 0.0
      %238 = vmatpush1.msra.mxu0 0.0
      %239 = vmatprep.subr.mxu0 0.0
      %240 = vmatpush1.msra.mxu0 0.0
      %241 = vmatprep.subr.mxu0 0.0
      %242 = vmatpush1.msra.mxu0 0.0
      %243 = vmatprep.subr.mxu0 0.0
      %244 = vmatpush1.msra.mxu0 0.0
      %245 = vmatprep.subr.mxu0 0.0
      %246 = vmatpush1.msra.mxu0 0.0
      %247 = vmatprep.subr.mxu0 0.0
      %248 = vmatpush1.msra.mxu0 0.0
      %249 = vmatprep.subr.mxu0 0.0
      %250 = vmatpush1.msra.mxu0 0.0
      %251 = vmatprep.subr.mxu0 0.0
      %252 = vmatpush1.msra.mxu0 0.0
      %253 = vmatprep.subr.mxu0 0.0
      %254 = vmatpush1.msra.mxu0 0.0
      %255 = vmatprep.subr.mxu0 0.0
      %256 = vmatpush1.msra.mxu0 0.0
      %257 = vmatprep.subr.mxu0 0.0
      %258 = vmatpush1.msra.mxu0 0.0
      %259 = vmatprep.subr.mxu0 0.0
      %260 = vmatpush1.msra.mxu0 0.0
      %261 = vmatprep.subr.mxu0 0.0
      %262 = vmatpush1.msra.mxu0 0.0
      %263 = vmatprep.subr.mxu0 0.0
      %264 = vmatpush1.msra.mxu0 0.0
      %265 = vmatprep.subr.mxu0 0.0
      %266 = vmatpush1.msra.mxu0 0.0
      %267 = vmatprep.mubr.f32.mxu0 0.0
      %268 = vmatmul.mubr.f32.gmra.mrb[0].mxu0 %v179
      %v269 = vpop.f32.mrb[0].mxu0
      %v270 = vadd.f32 %v201, %v269
      %v271 = vpop.f32.mrb[0].mxu0
      %272 = vdwg.mxu0
      %v273 = vld [vmem:[#allocation8] sm:$0xff]
      %v274 = vld [vmem:[#allocation8 + $0x8] sm:$0xff]
      %v275 = vld [vmem:[#allocation8 + $0x10] sm:$0xff]
      %v276 = vld [vmem:[#allocation8 + $0x18] sm:$0xff]
      %v277 = vld [vmem:[#allocation8 + $0x20] sm:$0xff]
      %v278 = vld [vmem:[#allocation8 + $0x28] sm:$0xff]
      %v279 = vld [vmem:[#allocation8 + $0x30] sm:$0xff]
      %v280 = vld [vmem:[#allocation8 + $0x38] sm:$0xff]
      %v281 = vld [vmem:[#allocation8 + $0x40] sm:$0xff]
      %v282 = vld [vmem:[#allocation8 + $0x48] sm:$0xff]
      %v283 = vld [vmem:[#allocation8 + $0x50] sm:$0xff]
      %v284 = vld [vmem:[#allocation8 + $0x58] sm:$0xff]
      %v285 = vld [vmem:[#allocation8 + $0x60] sm:$0xff]
      %v286 = vld [vmem:[#allocation8 + $0x68] sm:$0xff]
      %v287 = vld [vmem:[#allocation8 + $0x70] sm:$0xff]
      %v288 = vld [vmem:[#allocation8 + $0x78] sm:$0xff]
      %v289 = vld [vmem:[%s4] sm:$0x1]
      %v291 = vlaneseq
      %v292 = vshrl.u32 %v291, 7
      %v293 = vsub.s32 0, %v292
      %v294 = vrot.slane %v289, %v293
      %296 = vmatprep.subr.mxu0 0.0
      %297 = vmatpush1.msra.mxu0 %v273
      %298 = vmatprep.subr.mxu0 0.0
      %299 = vmatpush1.msra.mxu0 %v274
      %300 = vmatprep.subr.mxu0 0.0
      %301 = vmatpush1.msra.mxu0 %v275
      %302 = vmatprep.subr.mxu0 0.0
      %303 = vmatpush1.msra.mxu0 %v276
      %304 = vmatprep.subr.mxu0 0.0
      %305 = vmatpush1.msra.mxu0 %v277
      %306 = vmatprep.subr.mxu0 0.0
      %307 = vmatpush1.msra.mxu0 %v278
      %308 = vmatprep.subr.mxu0 0.0
      %309 = vmatpush1.msra.mxu0 %v279
      %310 = vmatprep.subr.mxu0 0.0
      %311 = vmatpush1.msra.mxu0 %v280
      %312 = vmatprep.subr.mxu0 0.0
      %313 = vmatpush1.msra.mxu0 %v281
      %314 = vmatprep.subr.mxu0 0.0
      %315 = vmatpush1.msra.mxu0 %v282
      %316 = vmatprep.subr.mxu0 0.0
      %317 = vmatpush1.msra.mxu0 %v283
      %318 = vmatprep.subr.mxu0 0.0
      %319 = vmatpush1.msra.mxu0 %v284
      %320 = vmatprep.subr.mxu0 0.0
      %321 = vmatpush1.msra.mxu0 %v285
      %322 = vmatprep.subr.mxu0 0.0
      %323 = vmatpush1.msra.mxu0 %v286
      %324 = vmatprep.subr.mxu0 0.0
      %325 = vmatpush1.msra.mxu0 %v287
      %326 = vmatprep.subr.mxu0 0.0
      %327 = vmatpush1.msra.mxu0 %v288
      %328 = vmatprep.subr.mxu0 0.0
      %329 = vmatpush1.msra.mxu0 0.0
      %330 = vmatprep.subr.mxu0 0.0
      %331 = vmatpush1.msra.mxu0 0.0
      %332 = vmatprep.subr.mxu0 0.0
      %333 = vmatpush1.msra.mxu0 0.0
      %334 = vmatprep.subr.mxu0 0.0
      %335 = vmatpush1.msra.mxu0 0.0
      %336 = vmatprep.subr.mxu0 0.0
      %337 = vmatpush1.msra.mxu0 0.0
      %338 = vmatprep.subr.mxu0 0.0
      %339 = vmatpush1.msra.mxu0 0.0
      %340 = vmatprep.subr.mxu0 0.0
      %341 = vmatpush1.msra.mxu0 0.0
      %342 = vmatprep.subr.mxu0 0.0
      %343 = vmatpush1.msra.mxu0 0.0
      %344 = vmatprep.subr.mxu0 0.0
      %345 = vmatpush1.msra.mxu0 0.0
      %346 = vmatprep.subr.mxu0 0.0
      %347 = vmatpush1.msra.mxu0 0.0
      %348 = vmatprep.subr.mxu0 0.0
      %349 = vmatpush1.msra.mxu0 0.0
      %350 = vmatprep.subr.mxu0 0.0
      %351 = vmatpush1.msra.mxu0 0.0
      %352 = vmatprep.subr.mxu0 0.0
      %353 = vmatpush1.msra.mxu0 0.0
      %354 = vmatprep.subr.mxu0 0.0
      %355 = vmatpush1.msra.mxu0 0.0
      %356 = vmatprep.subr.mxu0 0.0
      %357 = vmatpush1.msra.mxu0 0.0
      %358 = vmatprep.subr.mxu0 0.0
      %359 = vmatpush1.msra.mxu0 0.0
      %360 = vmatprep.mubr.f32.mxu0 0.0
      %361 = vmatmul.mubr.f32.gmra.mrb[0].mxu0 %v270
      %v362 = vpop.f32.mrb[0].mxu0
      %v363 = vadd.f32 %v294, %v362
      %v364 = vpop.f32.mrb[0].mxu0
      %365 = vdwg.mxu0
      %366 = vst [vmem:[#allocation9] sm:$0xff] %v363
    $region41: #{tpu_custom_call.1} parent=1 // pred_fallthru
      _
    // Predicated region
    $region42: #{tpu_custom_call.1} parent=1 // pred_check
      _
    $region43: #{tpu_custom_call.1} parent=1 // pred_check_branch
      %368 = sbr.rel (0) target = $region45
    $region44: #{tpu_custom_call.1} parent=1 // pred_region
      %s370 = ssub.s32 128, 128
      %371 = vsyncadd [#allocation5], %s370
      %s373 = sshll.u32 [#allocation9], 4
      %s374 = int_to_ptr.vmem [resolvable:$true] %s373
      %376 = dma.vmem_to_hbm [thread:$0]  %s374, 128, %s5, [#allocation5]
    $region45: #{tpu_custom_call.1} parent=1 // pred_fallthru
      _
    // Predicated region
    $region46: #{tpu_custom_call.1} parent=1 // pred_check
      _
    $region47: #{tpu_custom_call.1} parent=1 // pred_check_branch
      %378 = sbr.rel (0) target = $region49
    $region48: #{tpu_custom_call.1} parent=1 // pred_region
      %379 = dma.done [#allocation5], 128
    $region49: #{tpu_custom_call.1} parent=1 // pred_fallthru
      _
    %380 = vsyncpa [#allocation4], 1
    %381 = vsyncpa [#allocation7], 1
    %382 = vsyncpa [#allocation5], 1

</llo_original>
